<compile_context>
chip_gen: v6e
topology: v6e:2x2x1
jax: 0.10.0
libtpu: 0.0.40
codegen_flags: <defaults>
</compile_context>

<pallas_src>
import functools

import jax
import jax.numpy as jnp
import numpy as np
from jax import lax
from jax.experimental import pallas as pl
from jax.experimental.pallas import tpu as pltpu

_LANES = 128
_SUBLANES = 8
_BF16_PACK = 16          # bf16 packs 16 rows per vreg sublane group


def _round_up(x, m):
    return (x + m - 1) // m * m


def _vmem_capacity_bytes():
    try:
        info = pltpu.get_tpu_info()
        return int(getattr(info, "vmem_capacity_bytes", 64 << 20))
    except Exception:
        return 64 << 20          # conservative (v7x-sized) fallback


def _pick_tile_oh(oh, ow, n_batch, k_total, cout, out_bytes,
                  row_budget_bytes=8 << 20):
    """Largest OH tile that (a) divides OH, (b) keeps the per-step lhs/acc/out
    footprint under row_budget_bytes, (c) keeps the output block sublane
    aligned, and (d) still yields >= ceil(4/N) tiles so small batches get
    pipelining and both TensorCores."""
    per_row = ow * (k_total * 2 + cout * 4 + 2 * cout * out_bytes) + 1
    max_rows = max(1, row_budget_bytes // per_row)
    min_tiles = max(1, -(-4 // max(1, n_batch)))     # ceil(4 / N)
    good = []
    for cand in range(1, oh + 1):
        if oh % cand:
            continue
        if cand * ow > max_rows and cand != oh:
            continue
        if (cand * ow) % _SUBLANES and cand != oh:
            continue
        if oh // cand >= min_tiles:
            good.append(cand)
    if good:
        return max(good)
    return oh                     # single full-height tile (block == full dim)


# ---------------------------------------------------------------------------
# Pallas kernel: direct conv (implicit GEMM, fused taps) + folded-BN epilogue
# ---------------------------------------------------------------------------
def _conv_bn_kernel(x_ref, w_ref, b_ref, o_ref, *, kh, kw, stride, dilation,
                    tile_oh, ow, cin_pad, fuse_taps):
    # x_ref: (1, HP, WP, cin_pad)            bf16  whole padded NHWC image
    # w_ref: (KH*KW*cin_pad, cout)           bf16  tap-major fused weight (BN folded)
    # b_ref: (1, cout)                       f32   folded BN bias
    # o_ref: (1, tile_oh*OW, cout)           out_dtype
    cout = o_ref.shape[2]
    tile_m = tile_oh * ow
    rows = (tile_oh - 1) * stride + (kh - 1) * dilation + 1

    t = pl.program_id(1)
    row0 = pl.multiple_of(t * (tile_oh * stride), tile_oh * stride)
    # Row window for this OH tile; H is not a lane/sublane dim, so this dynamic
    # slice of the resident image is cheap.
    xt = x_ref[0, pl.ds(row0, rows), :, :]           # (rows, WP, cin_pad) bf16

    def tap_slice(i, j):
        hs = i * dilation
        ws = j * dilation
        he = hs + stride * (tile_oh - 1) + 1
        we = ws + stride * (ow - 1) + 1
        # TODO(synk): for stride > 1, fold the stride into channels on the host
        # (space-to-depth) so this slice is always stride-1 (no per-tap XLU work).
        p = lax.slice(xt, (hs, ws, 0), (he, we, cin_pad),
                      (stride, stride, 1))            # (tile_oh, ow, cin_pad)
        return p.reshape(tile_m, cin_pad)

    if fuse_taps:
        # Small-Cin path: one MXU dot with K = KH*KW*cin_pad (dense contraction)
        # instead of KH*KW depth-starved dots.
        lhs = jnp.concatenate(
            [tap_slice(i, j) for i in range(kh) for j in range(kw)], axis=-1)
        acc = jnp.dot(lhs, w_ref[...], preferred_element_type=jnp.float32)
        acc = acc + b_ref[...]
    else:
        # Large-Cin path: per-tap dots (K = cin_pad already >= 128); start the
        # accumulator from the folded BN bias -> no separate epilogue add.
        acc = jnp.broadcast_to(b_ref[...], (tile_m, cout))
        for i in range(kh):
            for j in range(kw):
                k0 = (i * kw + j) * cin_pad
                acc = acc + jnp.dot(tap_slice(i, j),
                                    w_ref[pl.ds(k0, cin_pad), :],
                                    preferred_element_type=jnp.float32)

    o_ref[0] = acc.astype(o_ref.dtype)


def _fused_conv_bn(x_pad, w_mat, bias, *, kh, kw, stride, dilation, oh, ow,
                   tile_oh, cin_pad, fuse_taps, out_dtype, vmem_limit_bytes):
    """x_pad: (N, HP, WP, cin_pad) bf16; w_mat: (KH*KW*cin_pad, cout) bf16;
    bias: (1, cout) f32  ->  (N, OH*OW, cout) out_dtype."""
    N, HP, WP, _ = x_pad.shape
    K, cout = w_mat.shape
    n_tiles = oh // tile_oh

    kernel = functools.partial(_conv_bn_kernel, kh=kh, kw=kw, stride=stride,
                               dilation=dilation, tile_oh=tile_oh, ow=ow,
                               cin_pad=cin_pad, fuse_taps=fuse_taps)

    return pl.pallas_call(
        kernel,
        out_shape=jax.ShapeDtypeStruct((N, oh * ow, cout), out_dtype),
        grid_spec=pltpu.PrefetchScalarGridSpec(
            num_scalar_prefetch=0,
            grid=(N, n_tiles),
            in_specs=[
                # Whole padded image per batch element; constant index along the
                # OH-tile axis -> DMA'd once per n and VMEM-resident across tiles.
                # TODO(synk): for very large images switch to a per-tile row-window
                # DMA so the input footprint is also bounded.
                pl.BlockSpec((1, HP, WP, cin_pad), lambda n, t: (n, 0, 0, 0)),
                # Fused-tap weight + bias: constant index -> fetched once, resident.
                # (pl.Buffered(1) would trim their duplicate buffer; footprint is tiny.)
                pl.BlockSpec((K, cout), lambda n, t: (0, 0)),
                pl.BlockSpec((1, cout), lambda n, t: (0, 0)),
            ],
            out_specs=pl.BlockSpec((1, tile_oh * ow, cout),
                                   lambda n, t: (n, t, 0)),
        ),
        compiler_params=pltpu.CompilerParams(
            dimension_semantics=("parallel", "parallel"),
            vmem_limit_bytes=vmem_limit_bytes,
        ),
    )(x_pad, w_mat, bias)


# ---------------------------------------------------------------------------
# Module wrapper (Conv2d bias=False + BatchNorm2d eval mode)
# ---------------------------------------------------------------------------
class BasicConv2dPallas:
    """Conv2d(bias=False) + BatchNorm2d (eval mode); forward = bn(conv(x))."""

    def __init__(self, in_planes, out_planes, kernel_size, stride=1,
                 padding=0, dilation=1, *, key=None, eps=1e-5,
                 out_dtype=jnp.bfloat16):
        if isinstance(kernel_size, int):
            kernel_size = (kernel_size, kernel_size)
        self.in_planes = in_planes
        self.out_planes = out_planes
        self.kh, self.kw = kernel_size
        self.stride = stride
        self.padding = padding
        self.dilation = dilation
        self.eps = eps
        self.out_dtype = out_dtype

        key = jax.random.PRNGKey(0) if key is None else key
        k_w, k_g, k_b, k_m, k_v = jax.random.split(key, 5)
        fan_in = in_planes * self.kh * self.kw
        bound = 1.0 / np.sqrt(fan_in)
        # Conv weight: (C_out, C_in, KH, KW), no bias (PyTorch OIHW layout).
        self.weight = jax.random.uniform(
            k_w, (out_planes, in_planes, self.kh, self.kw),
            minval=-bound, maxval=bound, dtype=jnp.float32)
        # BatchNorm parameters / running stats (deterministic, non-trivial).
        self.gamma = 1.0 + 0.1 * jax.random.normal(k_g, (out_planes,), jnp.float32)
        self.beta = 0.1 * jax.random.normal(k_b, (out_planes,), jnp.float32)
        self.running_mean = 0.1 * jax.random.normal(k_m, (out_planes,), jnp.float32)
        self.running_var = 1.0 + 0.1 * jax.random.uniform(k_v, (out_planes,), jnp.float32)

    def __call__(self, x_nchw):
        N, C, H, W = x_nchw.shape
        assert C == self.in_planes
        kh, kw, s, p, d = self.kh, self.kw, self.stride, self.padding, self.dilation
        OH = (H + 2 * p - d * (kh - 1) - 1) // s + 1
        OW = (W + 2 * p - d * (kw - 1) - 1) // s + 1

        # Fold BN (eval mode): scale -> weight, bias stays separate (f32 epilogue).
        scale = self.gamma / jnp.sqrt(self.running_var + self.eps)   # (C_out,)
        bias = self.beta - self.running_mean * scale                 # (C_out,)
        w_folded = self.weight * scale[:, None, None, None]          # (O,C,KH,KW)

        # Channel padding: Cin to bf16 sublane pack (16); Cout only padded to a
        # lane multiple when it is already >= 128 (otherwise unpadded + masked vst
        # beats 16x padded writeback).
        cin_pad = _round_up(C, _BF16_PACK)
        cout = self.out_planes
        cout_out = cout if cout < _LANES else _round_up(cout, _LANES)
        fuse_taps = cin_pad < _LANES
        k_total = kh * kw * cin_pad

        # Tap-major, channel-minor fused weight matrix (KH*KW*cin_pad, cout_out).
        w_taps = jnp.transpose(w_folded, (2, 3, 1, 0)).reshape(kh * kw, C, cout)
        w_taps = jnp.pad(w_taps, ((0, 0), (0, cin_pad - C), (0, cout_out - cout)))
        w_mat = w_taps.reshape(k_total, cout_out).astype(jnp.bfloat16)
        bias_pad = jnp.pad(bias, (0, cout_out - cout)).reshape(1, cout_out)
        bias_pad = bias_pad.astype(jnp.float32)

        # NHWC, spatial zero-pad, channel pad, bf16 (no redundant f32 cast).
        x_nhwc = jnp.transpose(x_nchw, (0, 2, 3, 1))
        x_pad = jnp.pad(x_nhwc, ((0, 0), (p, p), (p, p), (0, cin_pad - C)))
        x_pad = x_pad.astype(jnp.bfloat16)
        HP, WP = H + 2 * p, W + 2 * p

        out_bytes = np.dtype(self.out_dtype).itemsize
        tile_oh = _pick_tile_oh(OH, OW, N, k_total, cout_out, out_bytes)
        tile_m = tile_oh * OW
        rows = (tile_oh - 1) * s + (kh - 1) * d + 1

        # Exact per-step VMEM footprint + margin, capped at ~5/8 of physical VMEM
        # (~40 MiB on v7x's 64 MiB, ~80 MiB on v5e/v6e's 128 MiB).
        need = (2 * HP * WP * cin_pad * 2            # input block (dbl-buffered bf16)
                + 2 * k_total * cout_out * 2         # weight (constant index)
                + 2 * cout_out * 4                   # bias
                + 2 * tile_m * cout_out * out_bytes  # output blocks
                + tile_m * k_total * 2               # fused-K lhs (bf16)
                + tile_m * cout_out * 4              # f32 accumulator
                + rows * WP * cin_pad * 2)           # row-window temp
        cap = (_vmem_capacity_bytes() * 5) // 8
        vmem_limit = int(min(cap, max(12 << 20, need * 3 // 2 + (2 << 20))))

        out = _fused_conv_bn(x_pad, w_mat, bias_pad, kh=kh, kw=kw, stride=s,
                             dilation=d, oh=OH, ow=OW, tile_oh=tile_oh,
                             cin_pad=cin_pad, fuse_taps=fuse_taps,
                             out_dtype=self.out_dtype,
                             vmem_limit_bytes=vmem_limit)

        # NOTE: when chaining these blocks (Inception-style), keep activations in
        # NHWC between layers instead of transposing back per call.
        out = out.reshape(N, OH, OW, cout_out)[..., :cout]
        return jnp.transpose(out, (0, 3, 1, 2))      # PyTorch NCHW


# ---------------------------------------------------------------------------
# Pure-JAX reference (mirrors the kernel's bf16 operand + output rounding)
# ---------------------------------------------------------------------------
def _reference(mod: BasicConv2dPallas, x_nchw):
    scale = mod.gamma / jnp.sqrt(mod.running_var + mod.eps)
    bias = mod.beta - mod.running_mean * scale
    w_folded = mod.weight * scale[:, None, None, None]
    wq = w_folded.astype(jnp.bfloat16).astype(jnp.float32)
    xq = x_nchw.astype(jnp.bfloat16).astype(jnp.float32)
    y = lax.conv_general_dilated(
        xq, wq,
        window_strides=(mod.stride, mod.stride),
        padding=[(mod.padding, mod.padding), (mod.padding, mod.padding)],
        rhs_dilation=(mod.dilation, mod.dilation),
        dimension_numbers=("NCHW", "OIHW", "NCHW"),
        precision=lax.Precision.HIGHEST)
    y = y + bias[None, :, None, None]
    return y.astype(mod.out_dtype).astype(jnp.float32)


if __name__ == "__main__":
    key = jax.random.PRNGKey(0)
    k_x, k_p = jax.random.split(key)

    # Small shapes consistent with the module: N=2, C_in=4, H=W=16, 3x3, pad=1.
    N, C_in, H, W = 2, 4, 16, 16
    C_out, ksize, stride, padding, dilation = 8, 3, 1, 1, 1

    x = jax.random.normal(k_x, (N, C_in, H, W), dtype=jnp.float32)
    module = BasicConv2dPallas(C_in, C_out, ksize, stride=stride,
                               padding=padding, dilation=dilation, key=k_p)

    y = jax.block_until_ready(module(x))
    y_ref = jax.block_until_ready(_reference(module, x))
    np.testing.assert_allclose(np.asarray(y).astype(np.float32),
                               np.asarray(y_ref).astype(np.float32),
                               rtol=2e-2, atol=2e-2)

    print("KERNEL_OK")
</pallas_src>

<mosaic_0001>
module attributes {stable_mosaic.version = 11 : i64} {
  func.func @_conv_bn_kernel(%arg0: i32, %arg1: i32, %arg2: memref<1x18x18x16xbf16, #tpu.memory_space<vmem>>, %arg3: memref<144x8xbf16, #tpu.memory_space<vmem>>, %arg4: memref<1x8xf32, #tpu.memory_space<vmem>>, %arg5: memref<1x128x8xbf16, #tpu.memory_space<vmem>>) attributes {dimension_semantics = [#tpu.dimension_semantics<parallel>, #tpu.dimension_semantics<parallel>], iteration_bounds = array<i64: 2, 2>, scalar_prefetch = 0 : i64, scratch_operands = 0 : i64, tpu.core_type = #tpu.core_type<tc>, window_params = [{transform_indices = @transform_0, window_bounds = array<i64: 1, 18, 18, 16>}, {pipeline_mode = #tpu.pipeline_mode<synchronous>, transform_indices = @transform_1, window_bounds = array<i64: 144, 8>}, {pipeline_mode = #tpu.pipeline_mode<synchronous>, transform_indices = @transform_2, window_bounds = array<i64: 1, 8>}, {transform_indices = @transform_3, window_bounds = array<i64: 1, 128, 8>}]} {
    %c8_i32 = arith.constant 8 : i32
    %0 = arith.muli %arg1, %c8_i32 : i32
    %1 = tpu.assume_multiple %0, 8 : i32
    %c0 = arith.constant 0 : index
    %2 = arith.index_cast %1 : i32 to index
    %c0_0 = arith.constant 0 : index
    %c0_1 = arith.constant 0 : index
    %3 = vector.load %arg2[%c0, %2, %c0_0, %c0_1] : memref<1x18x18x16xbf16, #tpu.memory_space<vmem>>, vector<1x10x18x16xbf16>
    %4 = vector.shape_cast %3 : vector<1x10x18x16xbf16> to vector<10x18x16xbf16>
    %5 = vector.extract_strided_slice %4 {offsets = [0, 0, 0], sizes = [8, 16, 16], strides = [1, 1, 1]} : vector<10x18x16xbf16> to vector<8x16x16xbf16>
    %6 = vector.shape_cast %5 : vector<8x16x16xbf16> to vector<128x16xbf16>
    %7 = vector.extract_strided_slice %4 {offsets = [0, 1, 0], sizes = [8, 16, 16], strides = [1, 1, 1]} : vector<10x18x16xbf16> to vector<8x16x16xbf16>
    %8 = vector.shape_cast %7 : vector<8x16x16xbf16> to vector<128x16xbf16>
    %9 = vector.extract_strided_slice %4 {offsets = [0, 2, 0], sizes = [8, 16, 16], strides = [1, 1, 1]} : vector<10x18x16xbf16> to vector<8x16x16xbf16>
    %10 = vector.shape_cast %9 : vector<8x16x16xbf16> to vector<128x16xbf16>
    %11 = vector.extract_strided_slice %4 {offsets = [1, 0, 0], sizes = [8, 16, 16], strides = [1, 1, 1]} : vector<10x18x16xbf16> to vector<8x16x16xbf16>
    %12 = vector.shape_cast %11 : vector<8x16x16xbf16> to vector<128x16xbf16>
    %13 = vector.extract_strided_slice %4 {offsets = [1, 1, 0], sizes = [8, 16, 16], strides = [1, 1, 1]} : vector<10x18x16xbf16> to vector<8x16x16xbf16>
    %14 = vector.shape_cast %13 : vector<8x16x16xbf16> to vector<128x16xbf16>
    %15 = vector.extract_strided_slice %4 {offsets = [1, 2, 0], sizes = [8, 16, 16], strides = [1, 1, 1]} : vector<10x18x16xbf16> to vector<8x16x16xbf16>
    %16 = vector.shape_cast %15 : vector<8x16x16xbf16> to vector<128x16xbf16>
    %17 = vector.extract_strided_slice %4 {offsets = [2, 0, 0], sizes = [8, 16, 16], strides = [1, 1, 1]} : vector<10x18x16xbf16> to vector<8x16x16xbf16>
    %18 = vector.shape_cast %17 : vector<8x16x16xbf16> to vector<128x16xbf16>
    %19 = vector.extract_strided_slice %4 {offsets = [2, 1, 0], sizes = [8, 16, 16], strides = [1, 1, 1]} : vector<10x18x16xbf16> to vector<8x16x16xbf16>
    %20 = vector.shape_cast %19 : vector<8x16x16xbf16> to vector<128x16xbf16>
    %21 = vector.extract_strided_slice %4 {offsets = [2, 2, 0], sizes = [8, 16, 16], strides = [1, 1, 1]} : vector<10x18x16xbf16> to vector<8x16x16xbf16>
    %22 = vector.shape_cast %21 : vector<8x16x16xbf16> to vector<128x16xbf16>
    %23 = tpu.concatenate %6, %8, %10, %12, %14, %16, %18, %20, %22 in 1 : vector<128x16xbf16>, vector<128x16xbf16>, vector<128x16xbf16>, vector<128x16xbf16>, vector<128x16xbf16>, vector<128x16xbf16>, vector<128x16xbf16>, vector<128x16xbf16>, vector<128x16xbf16> -> vector<128x144xbf16>
    %c0_2 = arith.constant 0 : index
    %c0_3 = arith.constant 0 : index
    %24 = vector.load %arg3[%c0_2, %c0_3] : memref<144x8xbf16, #tpu.memory_space<vmem>>, vector<144x8xbf16>
    %cst = arith.constant dense<0.000000e+00> : vector<128x8xf32>
    %25 = tpu.matmul %23, %24, %cst {dimension_numbers = #tpu.dot_dimension_numbers<[1], [0], [0], [1], [0, 0, 1, 1], [], []>} : vector<128x144xbf16>, vector<144x8xbf16>, vector<128x8xf32> -> vector<128x8xf32>
    %c0_4 = arith.constant 0 : index
    %c0_5 = arith.constant 0 : index
    %26 = vector.load %arg4[%c0_4, %c0_5] : memref<1x8xf32, #tpu.memory_space<vmem>>, vector<1x8xf32>
    %27 = vector.broadcast %26 : vector<1x8xf32> to vector<128x8xf32>
    %28 = arith.addf %25, %27 : vector<128x8xf32>
    %29 = arith.truncf %28 : vector<128x8xf32> to vector<128x8xbf16>
    %c0_6 = arith.constant 0 : index
    %c0_7 = arith.constant 0 : index
    %c0_8 = arith.constant 0 : index
    %30 = vector.load %arg5[%c0_6, %c0_7, %c0_8] : memref<1x128x8xbf16, #tpu.memory_space<vmem>>, vector<1x128x8xbf16>
    %31 = vector.shape_cast %30 : vector<1x128x8xbf16> to vector<128x8xbf16>
    %32 = vector.shape_cast %29 : vector<128x8xbf16> to vector<1x128x8xbf16>
    tpu.vector_store %arg5[%c0_6, %c0_7, %c0_8], %32 {strides = array<i32>} : memref<1x128x8xbf16, #tpu.memory_space<vmem>>, vector<1x128x8xbf16>,
    return
  }
  func.func @transform_0(%arg0: i32, %arg1: i32) -> (i32, i32, i32, i32) {
    %c0_i32 = arith.constant 0 : i32
    %c0_i32_0 = arith.constant 0 : i32
    %c0_i32_1 = arith.constant 0 : i32
    %c0_i32_2 = arith.constant 0 : i32
    return %arg0, %c0_i32, %c0_i32_0, %c0_i32_1 : i32, i32, i32, i32
  }
  func.func @transform_1(%arg0: i32, %arg1: i32) -> (i32, i32) {
    %c0_i32 = arith.constant 0 : i32
    %c0_i32_0 = arith.constant 0 : i32
    %c0_i32_1 = arith.constant 0 : i32
    return %c0_i32, %c0_i32_0 : i32, i32
  }
  func.func @transform_2(%arg0: i32, %arg1: i32) -> (i32, i32) {
    %c0_i32 = arith.constant 0 : i32
    %c0_i32_0 = arith.constant 0 : i32
    %c0_i32_1 = arith.constant 0 : i32
    return %c0_i32, %c0_i32_0 : i32, i32
  }
  func.func @transform_3(%arg0: i32, %arg1: i32) -> (i32, i32, i32) {
    %c0_i32 = arith.constant 0 : i32
    %c0_i32_0 = arith.constant 0 : i32
    return %arg0, %arg1, %c0_i32 : i32, i32, i32
  }
}

</mosaic_0001>

<llo_original>
// kernel: tpu_custom_call.1
$region0: #{tpu_custom_call.1}
  #allocation0 [shape = 'u32[]', space=smem, size = 0x4, offset = 0x4, fixed_abs, tag = 'smem constant byte address 0x4 - core index']
  #allocation1 [shape = 'u32[144,128]{1,0:T(1,128)}', space=vmem, size = 0x12000, scoped, tag = 'internal scratch']
  %s0 = inlined_call_operand.vmem [shape: bf16[2,18,18,16], index: 0, kind: input, shape index: {}]
  %s1 = inlined_call_operand.vmem [shape: bf16[144,8], index: 1, kind: input, shape index: {}]
  %s2 = inlined_call_operand.vmem [shape: f32[1,8], index: 2, kind: input, shape index: {}]
  %s3 = inlined_call_operand.vmem [shape: bf16[2,256,8], index: 3, kind: output, shape index: {}]
  %s4 = sld [smem:[#allocation0]]
  $region45: #{tpu_custom_call.1} parent=0
    _
  %s6 = ssub.s32 1, %s4
  %s7 = scalar_select 0, %s6, %s4
  loop: start=0, step=1, limit=6
  $region2: #{tpu_custom_call.1} parent=0 // loop_pre_header
    _
  $region3: #{tpu_custom_call.1} parent=0 // loop_header
    %s9 = sphi 0, %s13
    %p10 = scmp.ge.s32.totalorder %s9, 6
    %s16 = sphi 0, %s28
    %s17 = sphi 0, %s24
    %s18 = sphi 0, %s16
    %s19 = sphi 0, %s17
    %s20 = sphi 0, %s18
    %s21 = sphi 0, %s19
    %s31 = sphi 0, %s33
    %s34 = sphi 0, %s31
    %s35 = sphi 0, %s34
    %s51 = sphi 0, %s35
    %s55 = sphi 0, %s55
    %s57 = sphi 0, %s55
    %s58 = sphi 0, %s57
    %s72 = sphi 0, %s58
    %s76 = sphi 0, %s76
    %s78 = sphi 0, %s76
    %s79 = sphi 0, %s78
    %s93 = sphi 0, %s79
    %s101 = sphi 0, %s103
    %s104 = sphi 0, %s101
    %s105 = sphi 0, %s104
    %s121 = sphi 0, %s105
  $region4: #{tpu_custom_call.1} parent=0 // loop_header_branch
    %12 = sbr.rel (%p10) target = $region8
  $region5: #{tpu_custom_call.1} parent=0 // loop_body
    %s14 = ssub.s32 %s9, 1
    %s15 = ssub.s32 %s9, 2
    %s22 = sadd.s32 1, %s17
    %p23 = scmp.ge.s32.totalorder %s22, 2
    %s24 = scalar_select %p23, 0, %s22
    %s25 = sadd.s32 1, %s16
    %s26 = scalar_select %p23, %s25, %s16
    %p27 = scmp.ge.s32.totalorder %s26, 2
    %s28 = scalar_select %p27, 0, %s26
    %s29 = ssub.s32 %s16, %s28
    %p30 = scmp.eq.s32.totalorder %s29, 0
    %s32 = sadd.s32 %s31, 1
    %s33 = scalar_select %p30, %s31, %s32
    %p36 = pneg %p30
    %p37 = scmp.eq.s32.totalorder %s9, 3
    %p38 = por %p36, %p37
    %p39 = scmp.ne.s32.totalorder %s31, %s34
    %p40 = scmp.eq.s32.totalorder %s9, 0
    %p41 = por %p39, %p40
    %p42 = scmp.ne.s32.totalorder %s31, %s34
    %p43 = scmp.eq.s32.totalorder %s14, 3
    %p44 = por %p42, %p43
    %p45 = scmp.ne.s32.totalorder %s34, %s35
    %p46 = scmp.eq.s32.totalorder %s14, 0
    %p47 = por %p45, %p46
    %p48 = scmp.ne.s32.totalorder %s34, %s35
    %p49 = scmp.eq.s32.totalorder %s15, 3
    %p50 = por %p48, %p49
    %p52 = scmp.ne.s32.totalorder %s35, %s51
    %p53 = scmp.eq.s32.totalorder %s15, 0
    %p54 = por %p52, %p53
    %s56 = sadd.s32 %s55, 1
    %p59 = scmp.eq.s32.totalorder %s9, 3
    %p60 = scmp.ne.s32.totalorder %s55, %s57
    %p61 = scmp.eq.s32.totalorder %s9, 0
    %p62 = por %p60, %p61
    %p63 = scmp.ne.s32.totalorder %s55, %s57
    %p64 = scmp.eq.s32.totalorder %s14, 3
    %p65 = por %p63, %p64
    %p66 = scmp.ne.s32.totalorder %s57, %s58
    %p67 = scmp.eq.s32.totalorder %s14, 0
    %p68 = por %p66, %p67
    %p69 = scmp.ne.s32.totalorder %s57, %s58
    %p70 = scmp.eq.s32.totalorder %s15, 3
    %p71 = por %p69, %p70
    %p73 = scmp.ne.s32.totalorder %s58, %s72
    %p74 = scmp.eq.s32.totalorder %s15, 0
    %p75 = por %p73, %p74
    %s77 = sadd.s32 %s76, 1
    %p80 = scmp.eq.s32.totalorder %s9, 3
    %p81 = scmp.ne.s32.totalorder %s76, %s78
    %p82 = scmp.eq.s32.totalorder %s9, 0
    %p83 = por %p81, %p82
    %p84 = scmp.ne.s32.totalorder %s76, %s78
    %p85 = scmp.eq.s32.totalorder %s14, 3
    %p86 = por %p84, %p85
    %p87 = scmp.ne.s32.totalorder %s78, %s79
    %p88 = scmp.eq.s32.totalorder %s14, 0
    %p89 = por %p87, %p88
    %p90 = scmp.ne.s32.totalorder %s78, %s79
    %p91 = scmp.eq.s32.totalorder %s15, 3
    %p92 = por %p90, %p91
    %p94 = scmp.ne.s32.totalorder %s79, %s93
    %p95 = scmp.eq.s32.totalorder %s15, 0
    %p96 = por %p94, %p95
    %s97 = ssub.s32 %s16, %s28
    %s98 = ssub.s32 %s17, %s24
    %s99 = sor.u32 %s97, %s98
    %p100 = scmp.eq.s32.totalorder %s99, 0
    %s102 = sadd.s32 %s101, 1
    %s103 = scalar_select %p100, %s101, %s102
    %p106 = pneg %p100
    %p107 = scmp.eq.s32.totalorder %s9, 3
    %p108 = por %p106, %p107
    %p109 = scmp.ne.s32.totalorder %s101, %s104
    %p110 = scmp.eq.s32.totalorder %s9, 0
    %p111 = por %p109, %p110
    %p112 = scmp.ne.s32.totalorder %s101, %s104
    %p113 = scmp.eq.s32.totalorder %s14, 3
    %p114 = por %p112, %p113
    %p115 = scmp.ne.s32.totalorder %s104, %s105
    %p116 = scmp.eq.s32.totalorder %s14, 0
    %p117 = por %p115, %p116
    %p118 = scmp.ne.s32.totalorder %s104, %s105
    %p119 = scmp.eq.s32.totalorder %s15, 3
    %p120 = por %p118, %p119
    %p122 = scmp.ne.s32.totalorder %s105, %s121
    %p123 = scmp.eq.s32.totalorder %s15, 0
    %p124 = por %p122, %p123
    %p125 = scmp.le.s32.totalorder 1, %s9
    %p126 = scmp.lt.s32.totalorder %s9, 5
    %p127 = pnand %p125, %p126
    %p128 = pneg %p127
    // Predicated region
    $region9: #{tpu_custom_call.1} parent=5 // pred_check
      _
    $region10: #{tpu_custom_call.1} parent=5 // pred_check_branch
      %130 = sbr.rel (%p127) target = $region12
    $region11: #{tpu_custom_call.1} parent=5 // pred_region
      %s131 = ssub.s32 %s9, 1
      // Predicated region
      $region13: #{tpu_custom_call.1} parent=11 // pred_check
        %p132 = pneg %p68
      $region14: #{tpu_custom_call.1} parent=11 // pred_check_branch
        %134 = sbr.rel (%p132) target = $region16
      $region15: #{tpu_custom_call.1} parent=11 // pred_region
        _
      $region16: #{tpu_custom_call.1} parent=11 // pred_fallthru
        _
      // Predicated region
      $region17: #{tpu_custom_call.1} parent=11 // pred_check
        %p135 = pneg %p89
      $region18: #{tpu_custom_call.1} parent=11 // pred_check_branch
        %137 = sbr.rel (%p135) target = $region20
      $region19: #{tpu_custom_call.1} parent=11 // pred_region
        _
      $region20: #{tpu_custom_call.1} parent=11 // pred_fallthru
        _
    $region12: #{tpu_custom_call.1} parent=5 // pred_fallthru
      _
    %p138 = scmp.lt.s32.totalorder %s9, 4
    // Predicated region
    $region21: #{tpu_custom_call.1} parent=5 // pred_check
      %p139 = pneg %p138
    $region22: #{tpu_custom_call.1} parent=5 // pred_check_branch
      %141 = sbr.rel (%p139) target = $region24
    $region23: #{tpu_custom_call.1} parent=5 // pred_region
      // Predicated region
      $region25: #{tpu_custom_call.1} parent=23 // pred_check
        %p142 = pneg %p41
      $region26: #{tpu_custom_call.1} parent=23 // pred_check_branch
        %144 = sbr.rel (%p142) target = $region28
      $region27: #{tpu_custom_call.1} parent=23 // pred_region
        %p145 = scmp.lt.s32.totalorder %s16, 1
        %s146 = scalar_select %p145, %s16, 1
        %s147 = smul.addr %s146, 54
        %s148 = smul.addr %s147, 4
        %s149 = scalar_lea.vmem %s0, %s148
      $region28: #{tpu_custom_call.1} parent=23 // pred_fallthru
        _
    $region24: #{tpu_custom_call.1} parent=5 // pred_fallthru
      _
    %p150 = scmp.le.s32.totalorder 1, %s9
    %p151 = scmp.lt.s32.totalorder %s9, 5
    %p152 = pnand %p150, %p151
    %p153 = pneg %p152
    // Predicated region
    $region29: #{tpu_custom_call.1} parent=5 // pred_check
      _
    $region30: #{tpu_custom_call.1} parent=5 // pred_check_branch
      %155 = sbr.rel (%p152) target = $region32
    $region31: #{tpu_custom_call.1} parent=5 // pred_region
      %s156 = ssub.s32 %s9, 1
      %p157 = scmp.lt.s32.totalorder %s18, 1
      %s158 = scalar_select %p157, %s18, 1
      %s159 = smul.addr %s158, 54
      %s160 = smul.addr %s159, 4
      %s161 = scalar_lea.vmem %s0, %s160
      %p162 = pneg %p47
      %p163 = pneg %p44
      %p164 = pneg %p68
      %p165 = pneg %p65
      %p166 = pneg %p89
      %p167 = pneg %p86
      %p168 = pneg %p117
      %p169 = pneg %p114
      %s170 = smul.u32 16, %s19
      %p171 = scmp.lt.s32.totalorder %s18, 1
      %s172 = scalar_select %p171, %s18, 1
      %p173 = scmp.lt.s32.totalorder %s170, 31
      %s174 = scalar_select %p173, %s170, 31
      %s175 = smul.addr %s172, 32
      %s176 = sadd.s32 %s174, %s175
      %s177 = smul.addr %s176, 4
      %s178 = scalar_lea.vmem %s3, %s177
      %p179 = scmp.lt.s32.totalorder %s18, 1
      %s180 = scalar_select %p179, %s18, 1
      %s181 = smul.addr %s180, 54
      %s182 = smul.addr %s181, 4
      %s183 = scalar_lea.vmem %s0, %s182
      %s184 = smul.u32 16, %s19
      %p185 = scmp.lt.s32.totalorder %s18, 1
      %s186 = scalar_select %p185, %s18, 1
      %p187 = scmp.lt.s32.totalorder %s184, 31
      %s188 = scalar_select %p187, %s184, 31
      %s189 = smul.addr %s186, 32
      %s190 = sadd.s32 %s188, %s189
      %s191 = smul.addr %s190, 4
      %s192 = scalar_lea.vmem %s3, %s191
      %s193 = smul.u32 16, %s19
      %s195 = smul.u32 %s19, 8
      %s196 = smul.u32 %s195, 3
      %s197 = smul.addr %s196, 4
      %s198 = scalar_lea.vmem %s183, %s197
      %v199 = vld [vmem:[%s198] sm:$0xf]
      %v200 = vld [vmem:[%s198 + $0x4] sm:$0xf]
      %v201 = vld [vmem:[%s198 + $0x8] sm:$0x1]
      %v202 = vld [vmem:[%s198 + $0xc] sm:$0xf]
      %v203 = vld [vmem:[%s198 + $0x10] sm:$0xf]
      %v204 = vld [vmem:[%s198 + $0x14] sm:$0x1]
      %v205 = vld [vmem:[%s198 + $0x18] sm:$0xf]
      %v206 = vld [vmem:[%s198 + $0x1c] sm:$0xf]
      %v207 = vld [vmem:[%s198 + $0x20] sm:$0x1]
      %v208 = vld [vmem:[%s198 + $0x24] sm:$0xf]
      %v209 = vld [vmem:[%s198 + $0x28] sm:$0xf]
      %v210 = vld [vmem:[%s198 + $0x2c] sm:$0x1]
      %v211 = vld [vmem:[%s198 + $0x30] sm:$0xf]
      %v212 = vld [vmem:[%s198 + $0x34] sm:$0xf]
      %v213 = vld [vmem:[%s198 + $0x38] sm:$0x1]
      %v214 = vld [vmem:[%s198 + $0x3c] sm:$0xf]
      %v215 = vld [vmem:[%s198 + $0x40] sm:$0xf]
      %v216 = vld [vmem:[%s198 + $0x44] sm:$0x1]
      %v217 = vld [vmem:[%s198 + $0x48] sm:$0xf]
      %v218 = vld [vmem:[%s198 + $0x4c] sm:$0xf]
      %v219 = vld [vmem:[%s198 + $0x50] sm:$0x1]
      %v220 = vld [vmem:[%s198 + $0x54] sm:$0xf]
      %v221 = vld [vmem:[%s198 + $0x58] sm:$0xf]
      %v222 = vld [vmem:[%s198 + $0x5c] sm:$0x1]
      %v223 = vld [vmem:[%s198 + $0x60] sm:$0xf]
      %v224 = vld [vmem:[%s198 + $0x64] sm:$0xf]
      %v225 = vld [vmem:[%s198 + $0x68] sm:$0x1]
      %v226 = vld [vmem:[%s198 + $0x6c] sm:$0xf]
      %v227 = vld [vmem:[%s198 + $0x70] sm:$0xf]
      %v228 = vld [vmem:[%s198 + $0x74] sm:$0x1]
      %vm229 = vsmask.f32 3328
      %vm230 = vsmask.f32 7440
      %vm231 = vmor %vm229, %vm230
      %v233 = vshrl.u32 %v199, 16
      %v235 = vrot.slane %v233, 4
      %v236 = vshll.u32 %v199, 16
      %v238 = vrot.slane %v236, 5
      %v239 = vor.u32 %v235, %v238
      %v240 = vrot.slane %v239, 4
      %v242 = vshll.u32 %v200, 16
      %v244 = vrot.slane %v242, 5
      %v245 = vsel %vm231, %v240, %v244
      %v246 = vshrl.u32 %v200, 16
      %v248 = vrot.slane %v246, 4
      %v249 = vor.u32 %v248, %v244
      %v250 = vrot.slane %v249, 4
      %v252 = vshll.u32 %v201, 16
      %v254 = vrot.slane %v252, 5
      %v255 = vsel %vm231, %v250, %v254
      %v257 = vshrl.u32 %v202, 16
      %v259 = vrot.slane %v257, 4
      %v260 = vshll.u32 %v202, 16
      %v262 = vrot.slane %v260, 5
      %v263 = vor.u32 %v259, %v262
      %v264 = vrot.slane %v263, 4
      %v266 = vshll.u32 %v203, 16
      %v268 = vrot.slane %v266, 5
      %v269 = vsel %vm231, %v264, %v268
      %v270 = vshrl.u32 %v203, 16
      %v272 = vrot.slane %v270, 4
      %v273 = vor.u32 %v272, %v268
      %v274 = vrot.slane %v273, 4
      %v276 = vshll.u32 %v204, 16
      %v278 = vrot.slane %v276, 5
      %v279 = vsel %vm231, %v274, %v278
      %v281 = vshrl.u32 %v205, 16
      %v283 = vrot.slane %v281, 4
      %v284 = vshll.u32 %v205, 16
      %v286 = vrot.slane %v284, 5
      %v287 = vor.u32 %v283, %v286
      %v288 = vrot.slane %v287, 4
      %v290 = vshll.u32 %v206, 16
      %v292 = vrot.slane %v290, 5
      %v293 = vsel %vm231, %v288, %v292
      %v294 = vshrl.u32 %v206, 16
      %v296 = vrot.slane %v294, 4
      %v297 = vor.u32 %v296, %v292
      %v298 = vrot.slane %v297, 4
      %v300 = vshll.u32 %v207, 16
      %v302 = vrot.slane %v300, 5
      %v303 = vsel %vm231, %v298, %v302
      %v305 = vshrl.u32 %v208, 16
      %v307 = vrot.slane %v305, 4
      %v308 = vshll.u32 %v208, 16
      %v310 = vrot.slane %v308, 5
      %v311 = vor.u32 %v307, %v310
      %v312 = vrot.slane %v311, 4
      %v314 = vshll.u32 %v209, 16
      %v316 = vrot.slane %v314, 5
      %v317 = vsel %vm231, %v312, %v316
      %v318 = vshrl.u32 %v209, 16
      %v320 = vrot.slane %v318, 4
      %v321 = vor.u32 %v320, %v316
      %v322 = vrot.slane %v321, 4
      %v324 = vshll.u32 %v210, 16
      %v326 = vrot.slane %v324, 5
      %v327 = vsel %vm231, %v322, %v326
      %v329 = vshrl.u32 %v211, 16
      %v331 = vrot.slane %v329, 4
      %v332 = vshll.u32 %v211, 16
      %v334 = vrot.slane %v332, 5
      %v335 = vor.u32 %v331, %v334
      %v336 = vrot.slane %v335, 4
      %v338 = vshll.u32 %v212, 16
      %v340 = vrot.slane %v338, 5
      %v341 = vsel %vm231, %v336, %v340
      %v342 = vshrl.u32 %v212, 16
      %v344 = vrot.slane %v342, 4
      %v345 = vor.u32 %v344, %v340
      %v346 = vrot.slane %v345, 4
      %v348 = vshll.u32 %v213, 16
      %v350 = vrot.slane %v348, 5
      %v351 = vsel %vm231, %v346, %v350
      %v353 = vshrl.u32 %v214, 16
      %v355 = vrot.slane %v353, 4
      %v356 = vshll.u32 %v214, 16
      %v358 = vrot.slane %v356, 5
      %v359 = vor.u32 %v355, %v358
      %v360 = vrot.slane %v359, 4
      %v362 = vshll.u32 %v215, 16
      %v364 = vrot.slane %v362, 5
      %v365 = vsel %vm231, %v360, %v364
      %v366 = vshrl.u32 %v215, 16
      %v368 = vrot.slane %v366, 4
      %v369 = vor.u32 %v368, %v364
      %v370 = vrot.slane %v369, 4
      %v372 = vshll.u32 %v216, 16
      %v374 = vrot.slane %v372, 5
      %v375 = vsel %vm231, %v370, %v374
      %v377 = vshrl.u32 %v217, 16
      %v379 = vrot.slane %v377, 4
      %v380 = vshll.u32 %v217, 16
      %v382 = vrot.slane %v380, 5
      %v383 = vor.u32 %v379, %v382
      %v384 = vrot.slane %v383, 4
      %v386 = vshll.u32 %v218, 16
      %v388 = vrot.slane %v386, 5
      %v389 = vsel %vm231, %v384, %v388
      %v390 = vshrl.u32 %v218, 16
      %v392 = vrot.slane %v390, 4
      %v393 = vor.u32 %v392, %v388
      %v394 = vrot.slane %v393, 4
      %v396 = vshll.u32 %v219, 16
      %v398 = vrot.slane %v396, 5
      %v399 = vsel %vm231, %v394, %v398
      %v401 = vshrl.u32 %v220, 16
      %v403 = vrot.slane %v401, 4
      %v404 = vshll.u32 %v220, 16
      %v406 = vrot.slane %v404, 5
      %v407 = vor.u32 %v403, %v406
      %v408 = vrot.slane %v407, 4
      %v410 = vshll.u32 %v221, 16
      %v412 = vrot.slane %v410, 5
      %v413 = vsel %vm231, %v408, %v412
      %v414 = vshrl.u32 %v221, 16
      %v416 = vrot.slane %v414, 4
      %v417 = vor.u32 %v416, %v412
      %v418 = vrot.slane %v417, 4
      %v420 = vshll.u32 %v222, 16
      %v422 = vrot.slane %v420, 5
      %v423 = vsel %vm231, %v418, %v422
      %vm448 = vcmask 1042432
      %vm449 = vcmask 1046532
      %vm450 = vmor %vm448, %vm449
      %v451 = vrot.slane %v199, 5
      %v452 = vrot.slane %v451, 4
      %v453 = vrot.slane %v200, 5
      %v454 = vsel %vm450, %v452, %v453
      %v455 = vrot.slane %v453, 4
      %v456 = vrot.slane %v201, 5
      %v457 = vsel %vm450, %v455, %v456
      %v458 = vrot.slane %v202, 5
      %v459 = vrot.slane %v458, 4
      %v460 = vrot.slane %v203, 5
      %v461 = vsel %vm450, %v459, %v460
      %v462 = vrot.slane %v460, 4
      %v463 = vrot.slane %v204, 5
      %v464 = vsel %vm450, %v462, %v463
      %v465 = vrot.slane %v205, 5
      %v466 = vrot.slane %v465, 4
      %v467 = vrot.slane %v206, 5
      %v468 = vsel %vm450, %v466, %v467
      %v469 = vrot.slane %v467, 4
      %v470 = vrot.slane %v207, 5
      %v471 = vsel %vm450, %v469, %v470
      %v472 = vrot.slane %v208, 5
      %v473 = vrot.slane %v472, 4
      %v474 = vrot.slane %v209, 5
      %v475 = vsel %vm450, %v473, %v474
      %v476 = vrot.slane %v474, 4
      %v477 = vrot.slane %v210, 5
      %v478 = vsel %vm450, %v476, %v477
      %v479 = vrot.slane %v211, 5
      %v480 = vrot.slane %v479, 4
      %v481 = vrot.slane %v212, 5
      %v482 = vsel %vm450, %v480, %v481
      %v483 = vrot.slane %v481, 4
      %v484 = vrot.slane %v213, 5
      %v485 = vsel %vm450, %v483, %v484
      %v486 = vrot.slane %v214, 5
      %v487 = vrot.slane %v486, 4
      %v488 = vrot.slane %v215, 5
      %v489 = vsel %vm450, %v487, %v488
      %v490 = vrot.slane %v488, 4
      %v491 = vrot.slane %v216, 5
      %v492 = vsel %vm450, %v490, %v491
      %v493 = vrot.slane %v217, 5
      %v494 = vrot.slane %v493, 4
      %v495 = vrot.slane %v218, 5
      %v496 = vsel %vm450, %v494, %v495
      %v497 = vrot.slane %v495, 4
      %v498 = vrot.slane %v219, 5
      %v499 = vsel %vm450, %v497, %v498
      %v500 = vrot.slane %v220, 5
      %v501 = vrot.slane %v500, 4
      %v502 = vrot.slane %v221, 5
      %v503 = vsel %vm450, %v501, %v502
      %v504 = vrot.slane %v502, 4
      %v505 = vrot.slane %v222, 5
      %v506 = vsel %vm450, %v504, %v505
      %v508 = vshrl.u32 %v223, 16
      %v510 = vrot.slane %v508, 4
      %v511 = vshll.u32 %v223, 16
      %v513 = vrot.slane %v511, 5
      %v514 = vor.u32 %v510, %v513
      %v515 = vrot.slane %v514, 4
      %v517 = vshll.u32 %v224, 16
      %v519 = vrot.slane %v517, 5
      %v520 = vsel %vm231, %v515, %v519
      %v521 = vshrl.u32 %v224, 16
      %v523 = vrot.slane %v521, 4
      %v524 = vor.u32 %v523, %v519
      %v525 = vrot.slane %v524, 4
      %v527 = vshll.u32 %v225, 16
      %v529 = vrot.slane %v527, 5
      %v530 = vsel %vm231, %v525, %v529
      %v534 = vrot.slane %v223, 5
      %v535 = vrot.slane %v534, 4
      %v536 = vrot.slane %v224, 5
      %v537 = vsel %vm450, %v535, %v536
      %v538 = vrot.slane %v536, 4
      %v539 = vrot.slane %v225, 5
      %v540 = vsel %vm450, %v538, %v539
      %v542 = vshrl.u32 %v226, 16
      %v544 = vrot.slane %v542, 4
      %v545 = vshll.u32 %v226, 16
      %v547 = vrot.slane %v545, 5
      %v548 = vor.u32 %v544, %v547
      %v549 = vrot.slane %v548, 4
      %v551 = vshll.u32 %v227, 16
      %v553 = vrot.slane %v551, 5
      %v554 = vsel %vm231, %v549, %v553
      %v555 = vshrl.u32 %v227, 16
      %v557 = vrot.slane %v555, 4
      %v558 = vor.u32 %v557, %v553
      %v559 = vrot.slane %v558, 4
      %v561 = vshll.u32 %v228, 16
      %v563 = vrot.slane %v561, 5
      %v564 = vsel %vm231, %v559, %v563
      %v568 = vrot.slane %v226, 5
      %v569 = vrot.slane %v568, 4
      %v570 = vrot.slane %v227, 5
      %v571 = vsel %vm450, %v569, %v570
      %v572 = vrot.slane %v570, 4
      %v573 = vrot.slane %v228, 5
      %v574 = vsel %vm450, %v572, %v573
      %v575 = vunpack.c.l.b16 %v199
      %v576 = vunpack.c.l.b16 %v200
      %v577 = vunpack.c.l.b16 %v202
      %v578 = vunpack.c.l.b16 %v203
      %v579 = vunpack.c.l.b16 %v205
      %v580 = vunpack.c.l.b16 %v206
      %v581 = vunpack.c.l.b16 %v208
      %v582 = vunpack.c.l.b16 %v209
      %v583 = vunpack.c.l.b16 %v211
      %v584 = vunpack.c.l.b16 %v212
      %v585 = vunpack.c.l.b16 %v214
      %v586 = vunpack.c.l.b16 %v215
      %v587 = vunpack.c.l.b16 %v217
      %v588 = vunpack.c.l.b16 %v218
      %v589 = vunpack.c.l.b16 %v220
      %v590 = vunpack.c.l.b16 %v221
      %v591 = vpack.c.b16 %v576, %v575
      %v592 = vpack.c.b16 %v578, %v577
      %v593 = vpack.c.b16 %v580, %v579
      %v594 = vpack.c.b16 %v582, %v581
      %v595 = vpack.c.b16 %v584, %v583
      %v596 = vpack.c.b16 %v586, %v585
      %v597 = vpack.c.b16 %v588, %v587
      %v598 = vpack.c.b16 %v590, %v589
      %v599 = vunpack.c.l.b16 %v245
      %v600 = vunpack.c.l.b16 %v255
      %v601 = vunpack.c.l.b16 %v269
      %v602 = vunpack.c.l.b16 %v279
      %v603 = vunpack.c.l.b16 %v293
      %v604 = vunpack.c.l.b16 %v303
      %v605 = vunpack.c.l.b16 %v317
      %v606 = vunpack.c.l.b16 %v327
      %v607 = vunpack.c.l.b16 %v341
      %v608 = vunpack.c.l.b16 %v351
      %v609 = vunpack.c.l.b16 %v365
      %v610 = vunpack.c.l.b16 %v375
      %v611 = vunpack.c.l.b16 %v389
      %v612 = vunpack.c.l.b16 %v399
      %v613 = vunpack.c.l.b16 %v413
      %v614 = vunpack.c.l.b16 %v423
      %v615 = vpack.c.b16 %v600, %v599
      %v616 = vpack.c.b16 %v602, %v601
      %v617 = vpack.c.b16 %v604, %v603
      %v618 = vpack.c.b16 %v606, %v605
      %v619 = vpack.c.b16 %v608, %v607
      %v620 = vpack.c.b16 %v610, %v609
      %v621 = vpack.c.b16 %v612, %v611
      %v622 = vpack.c.b16 %v614, %v613
      %623 = vrot.lane.b32.xlu0 %v615, 16
      %v624 = vpop.permute.xlu0 %623
      %625 = vrot.lane.b32.xlu0 %v616, 16
      %v626 = vpop.permute.xlu0 %625
      %627 = vrot.lane.b32.xlu0 %v617, 16
      %v628 = vpop.permute.xlu0 %627
      %629 = vrot.lane.b32.xlu0 %v618, 16
      %v630 = vpop.permute.xlu0 %629
      %631 = vrot.lane.b32.xlu0 %v619, 16
      %v632 = vpop.permute.xlu0 %631
      %633 = vrot.lane.b32.xlu0 %v620, 16
      %v634 = vpop.permute.xlu0 %633
      %635 = vrot.lane.b32.xlu0 %v621, 16
      %v636 = vpop.permute.xlu0 %635
      %637 = vrot.lane.b32.xlu0 %v622, 16
      %v638 = vpop.permute.xlu0 %637
      %v639 = vunpack.c.l.b16 %v454
      %v640 = vunpack.c.l.b16 %v457
      %v641 = vunpack.c.l.b16 %v461
      %v642 = vunpack.c.l.b16 %v464
      %v643 = vunpack.c.l.b16 %v468
      %v644 = vunpack.c.l.b16 %v471
      %v645 = vunpack.c.l.b16 %v475
      %v646 = vunpack.c.l.b16 %v478
      %v647 = vunpack.c.l.b16 %v482
      %v648 = vunpack.c.l.b16 %v485
      %v649 = vunpack.c.l.b16 %v489
      %v650 = vunpack.c.l.b16 %v492
      %v651 = vunpack.c.l.b16 %v496
      %v652 = vunpack.c.l.b16 %v499
      %v653 = vunpack.c.l.b16 %v503
      %v654 = vunpack.c.l.b16 %v506
      %v655 = vpack.c.b16 %v640, %v639
      %v656 = vpack.c.b16 %v642, %v641
      %v657 = vpack.c.b16 %v644, %v643
      %v658 = vpack.c.b16 %v646, %v645
      %v659 = vpack.c.b16 %v648, %v647
      %v660 = vpack.c.b16 %v650, %v649
      %v661 = vpack.c.b16 %v652, %v651
      %v662 = vpack.c.b16 %v654, %v653
      %663 = vrot.lane.b32.xlu0 %v655, 32
      %v664 = vpop.permute.xlu0 %663
      %665 = vrot.lane.b32.xlu0 %v656, 32
      %v666 = vpop.permute.xlu0 %665
      %667 = vrot.lane.b32.xlu0 %v657, 32
      %v668 = vpop.permute.xlu0 %667
      %669 = vrot.lane.b32.xlu0 %v658, 32
      %v670 = vpop.permute.xlu0 %669
      %671 = vrot.lane.b32.xlu0 %v659, 32
      %v672 = vpop.permute.xlu0 %671
      %673 = vrot.lane.b32.xlu0 %v660, 32
      %v674 = vpop.permute.xlu0 %673
      %675 = vrot.lane.b32.xlu0 %v661, 32
      %v676 = vpop.permute.xlu0 %675
      %677 = vrot.lane.b32.xlu0 %v662, 32
      %v678 = vpop.permute.xlu0 %677
      %v679 = vunpack.c.l.b16 %v223
      %v680 = vunpack.c.l.b16 %v224
      %v681 = vpack.c.b16 %v680, %v679
      %682 = vrot.lane.b32.xlu0 %v592, 48
      %v683 = vpop.permute.xlu0 %682
      %684 = vrot.lane.b32.xlu0 %v593, 48
      %v685 = vpop.permute.xlu0 %684
      %686 = vrot.lane.b32.xlu0 %v594, 48
      %v687 = vpop.permute.xlu0 %686
      %688 = vrot.lane.b32.xlu0 %v595, 48
      %v689 = vpop.permute.xlu0 %688
      %690 = vrot.lane.b32.xlu0 %v596, 48
      %v691 = vpop.permute.xlu0 %690
      %692 = vrot.lane.b32.xlu0 %v597, 48
      %v693 = vpop.permute.xlu0 %692
      %694 = vrot.lane.b32.xlu0 %v598, 48
      %v695 = vpop.permute.xlu0 %694
      %696 = vrot.lane.b32.xlu0 %v681, 48
      %v697 = vpop.permute.xlu0 %696
      %v698 = vunpack.c.l.b16 %v520
      %v699 = vunpack.c.l.b16 %v530
      %v700 = vpack.c.b16 %v699, %v698
      %701 = vrot.lane.b32.xlu0 %v616, 64
      %v702 = vpop.permute.xlu0 %701
      %703 = vrot.lane.b32.xlu0 %v617, 64
      %v704 = vpop.permute.xlu0 %703
      %705 = vrot.lane.b32.xlu0 %v618, 64
      %v706 = vpop.permute.xlu0 %705
      %707 = vrot.lane.b32.xlu0 %v619, 64
      %v708 = vpop.permute.xlu0 %707
      %709 = vrot.lane.b32.xlu0 %v620, 64
      %v710 = vpop.permute.xlu0 %709
      %711 = vrot.lane.b32.xlu0 %v621, 64
      %v712 = vpop.permute.xlu0 %711
      %713 = vrot.lane.b32.xlu0 %v622, 64
      %v714 = vpop.permute.xlu0 %713
      %715 = vrot.lane.b32.xlu0 %v700, 64
      %v716 = vpop.permute.xlu0 %715
      %v717 = vunpack.c.l.b16 %v537
      %v718 = vunpack.c.l.b16 %v540
      %v719 = vpack.c.b16 %v718, %v717
      %720 = vrot.lane.b32.xlu0 %v656, 80
      %v721 = vpop.permute.xlu0 %720
      %722 = vrot.lane.b32.xlu0 %v657, 80
      %v723 = vpop.permute.xlu0 %722
      %724 = vrot.lane.b32.xlu0 %v658, 80
      %v725 = vpop.permute.xlu0 %724
      %726 = vrot.lane.b32.xlu0 %v659, 80
      %v727 = vpop.permute.xlu0 %726
      %728 = vrot.lane.b32.xlu0 %v660, 80
      %v729 = vpop.permute.xlu0 %728
      %730 = vrot.lane.b32.xlu0 %v661, 80
      %v731 = vpop.permute.xlu0 %730
      %732 = vrot.lane.b32.xlu0 %v662, 80
      %v733 = vpop.permute.xlu0 %732
      %734 = vrot.lane.b32.xlu0 %v719, 80
      %v735 = vpop.permute.xlu0 %734
      %v736 = vunpack.c.l.b16 %v226
      %v737 = vunpack.c.l.b16 %v227
      %v738 = vpack.c.b16 %v737, %v736
      %739 = vrot.lane.b32.xlu0 %v593, 96
      %v740 = vpop.permute.xlu0 %739
      %741 = vrot.lane.b32.xlu0 %v594, 96
      %v742 = vpop.permute.xlu0 %741
      %743 = vrot.lane.b32.xlu0 %v595, 96
      %v744 = vpop.permute.xlu0 %743
      %745 = vrot.lane.b32.xlu0 %v596, 96
      %v746 = vpop.permute.xlu0 %745
      %747 = vrot.lane.b32.xlu0 %v597, 96
      %v748 = vpop.permute.xlu0 %747
      %749 = vrot.lane.b32.xlu0 %v598, 96
      %v750 = vpop.permute.xlu0 %749
      %751 = vrot.lane.b32.xlu0 %v681, 96
      %v752 = vpop.permute.xlu0 %751
      %753 = vrot.lane.b32.xlu0 %v738, 96
      %v754 = vpop.permute.xlu0 %753
      %v755 = vunpack.c.l.b16 %v554
      %v756 = vunpack.c.l.b16 %v564
      %v757 = vpack.c.b16 %v756, %v755
      %758 = vrot.lane.b32.xlu0 %v617, 112
      %v759 = vpop.permute.xlu0 %758
      %760 = vrot.lane.b32.xlu0 %v618, 112
      %v761 = vpop.permute.xlu0 %760
      %762 = vrot.lane.b32.xlu0 %v619, 112
      %v763 = vpop.permute.xlu0 %762
      %764 = vrot.lane.b32.xlu0 %v620, 112
      %v765 = vpop.permute.xlu0 %764
      %766 = vrot.lane.b32.xlu0 %v621, 112
      %v767 = vpop.permute.xlu0 %766
      %768 = vrot.lane.b32.xlu0 %v622, 112
      %v769 = vpop.permute.xlu0 %768
      %770 = vrot.lane.b32.xlu0 %v700, 112
      %v771 = vpop.permute.xlu0 %770
      %772 = vrot.lane.b32.xlu0 %v757, 112
      %v773 = vpop.permute.xlu0 %772
      %v774 = vunpack.c.l.b16 %v571
      %v775 = vunpack.c.l.b16 %v574
      %v776 = vpack.c.b16 %v775, %v774
      %vm777 = vcmask 130048
      %v780 = vsel %vm777, %v591, %v624
      %v783 = vsel %vm777, %v592, %v626
      %v786 = vsel %vm777, %v593, %v628
      %v789 = vsel %vm777, %v594, %v630
      %v792 = vsel %vm777, %v595, %v632
      %v795 = vsel %vm777, %v596, %v634
      %v798 = vsel %vm777, %v597, %v636
      %v801 = vsel %vm777, %v598, %v638
      %vm802 = vcmask 261120
      %v804 = vsel %vm802, %v780, %v664
      %v806 = vsel %vm802, %v783, %v666
      %v808 = vsel %vm802, %v786, %v668
      %v810 = vsel %vm802, %v789, %v670
      %v812 = vsel %vm802, %v792, %v672
      %v814 = vsel %vm802, %v795, %v674
      %v816 = vsel %vm802, %v798, %v676
      %v818 = vsel %vm802, %v801, %v678
      %vm819 = vcmask 392192
      %v821 = vsel %vm819, %v804, %v683
      %v823 = vsel %vm819, %v806, %v685
      %v825 = vsel %vm819, %v808, %v687
      %v827 = vsel %vm819, %v810, %v689
      %v829 = vsel %vm819, %v812, %v691
      %v831 = vsel %vm819, %v814, %v693
      %v833 = vsel %vm819, %v816, %v695
      %v835 = vsel %vm819, %v818, %v697
      %vm836 = vcmask 523264
      %v838 = vsel %vm836, %v821, %v702
      %v840 = vsel %vm836, %v823, %v704
      %v842 = vsel %vm836, %v825, %v706
      %v844 = vsel %vm836, %v827, %v708
      %v846 = vsel %vm836, %v829, %v710
      %v848 = vsel %vm836, %v831, %v712
      %v850 = vsel %vm836, %v833, %v714
      %v852 = vsel %vm836, %v835, %v716
      %vm853 = vcmask 654336
      %v855 = vsel %vm853, %v838, %v721
      %v857 = vsel %vm853, %v840, %v723
      %v859 = vsel %vm853, %v842, %v725
      %v861 = vsel %vm853, %v844, %v727
      %v863 = vsel %vm853, %v846, %v729
      %v865 = vsel %vm853, %v848, %v731
      %v867 = vsel %vm853, %v850, %v733
      %v869 = vsel %vm853, %v852, %v735
      %vm870 = vcmask 785408
      %v872 = vsel %vm870, %v855, %v740
      %v874 = vsel %vm870, %v857, %v742
      %v876 = vsel %vm870, %v859, %v744
      %v878 = vsel %vm870, %v861, %v746
      %v880 = vsel %vm870, %v863, %v748
      %v882 = vsel %vm870, %v865, %v750
      %v884 = vsel %vm870, %v867, %v752
      %v886 = vsel %vm870, %v869, %v754
      %vm887 = vcmask 916480
      %v889 = vsel %vm887, %v872, %v759
      %v892 = vsel %vm887, %v874, %v761
      %v895 = vsel %vm887, %v876, %v763
      %v898 = vsel %vm887, %v878, %v765
      %v901 = vsel %vm887, %v880, %v767
      %v904 = vsel %vm887, %v882, %v769
      %v907 = vsel %vm887, %v884, %v771
      %v910 = vsel %vm887, %v886, %v773
      %v912 = vld [vmem:[%s1] sm:$0xf]
      %v913 = vld [vmem:[%s1 + $0x4] sm:$0xf]
      %v914 = vld [vmem:[%s1 + $0x8] sm:$0xf]
      %v915 = vld [vmem:[%s1 + $0xc] sm:$0xf]
      %v916 = vld [vmem:[%s1 + $0x10] sm:$0xf]
      %v917 = vld [vmem:[%s1 + $0x14] sm:$0xf]
      %v918 = vld [vmem:[%s1 + $0x18] sm:$0xf]
      %v919 = vld [vmem:[%s1 + $0x1c] sm:$0xf]
      %v920 = vld [vmem:[%s1 + $0x20] sm:$0xf]
      %v921 = vld [vmem:[%s1 + $0x24] sm:$0xf]
      %v922 = vld [vmem:[%s1 + $0x28] sm:$0xf]
      %v923 = vld [vmem:[%s1 + $0x2c] sm:$0xf]
      %v924 = vld [vmem:[%s1 + $0x30] sm:$0xf]
      %v925 = vld [vmem:[%s1 + $0x34] sm:$0xf]
      %v926 = vld [vmem:[%s1 + $0x38] sm:$0xf]
      %v927 = vld [vmem:[%s1 + $0x3c] sm:$0xf]
      %v928 = vld [vmem:[%s1 + $0x40] sm:$0xf]
      %v929 = vld [vmem:[%s1 + $0x44] sm:$0xf]
      %v930 = vld [vmem:[%s2] sm:$0x1]
      %v932 = vlaneseq
      %v933 = vshrl.u32 %v932, 7
      %v934 = vsub.s32 0, %v933
      %v935 = vrot.slane %v930, %v934
      %v955 = vunpack.c.l.b16 %v912
      %v956 = vunpack.c.l.b16 %v913
      %v957 = vunpack.c.l.b16 %v914
      %v958 = vunpack.c.l.b16 %v915
      %v959 = vunpack.c.l.b16 %v916
      %v960 = vunpack.c.l.b16 %v917
      %v961 = vunpack.c.l.b16 %v918
      %v962 = vunpack.c.l.b16 %v919
      %v963 = vunpack.c.l.b16 %v920
      %v964 = vunpack.c.l.b16 %v921
      %v965 = vunpack.c.l.b16 %v922
      %v966 = vunpack.c.l.b16 %v923
      %v967 = vunpack.c.l.b16 %v924
      %v968 = vunpack.c.l.b16 %v925
      %v969 = vunpack.c.l.b16 %v926
      %v970 = vunpack.c.l.b16 %v927
      %v971 = vunpack.c.l.b16 %v928
      %v972 = vunpack.c.l.b16 %v929
      %v973 = vpack.c.b16 %v956, %v955
      %v974 = vpack.c.b16 %v958, %v957
      %v975 = vpack.c.b16 %v960, %v959
      %v976 = vpack.c.b16 %v962, %v961
      %v977 = vpack.c.b16 %v964, %v963
      %v978 = vpack.c.b16 %v966, %v965
      %v979 = vpack.c.b16 %v968, %v967
      %v980 = vpack.c.b16 %v970, %v969
      %v981 = vpack.c.b16 %v972, %v971
      %v992 = vsel %vm777, %v657, 0
      %v995 = vsel %vm777, %v658, 0
      %v998 = vsel %vm777, %v659, 0
      %v1001 = vsel %vm777, %v660, 0
      %v1004 = vsel %vm777, %v661, 0
      %v1007 = vsel %vm777, %v662, 0
      %v1010 = vsel %vm777, %v719, 0
      %v1013 = vsel %vm777, %v776, 0
      %1015 = vmatprep.subr.bf16.mxu0 0
      %1016 = vmatpush1.bf16.msra.mxu0 %v980
      %1017 = vmatprep.subr.bf16.mxu0 0
      %1018 = vmatpush1.bf16.msra.mxu0 %v979
      %1019 = vmatprep.subr.bf16.mxu0 0
      %1020 = vmatpush1.bf16.msra.mxu0 %v978
      %1021 = vmatprep.subr.bf16.mxu0 0
      %1022 = vmatpush1.bf16.msra.mxu0 %v977
      %1023 = vmatprep.subr.bf16.mxu0 0
      %1024 = vmatpush1.bf16.msra.mxu0 %v976
      %1025 = vmatprep.subr.bf16.mxu0 0
      %1026 = vmatpush1.bf16.msra.mxu0 %v975
      %1027 = vmatprep.subr.bf16.mxu0 0
      %1028 = vmatpush1.bf16.msra.mxu0 %v974
      %1029 = vmatprep.subr.bf16.mxu0 0
      %1030 = vmatpush1.bf16.msra.mxu0 %v973
      %1031 = vmatprep.subr.bf16.mxu0 0
      %1032 = vmatpush2.bf16.msra.mxu0 0
      %1033 = vmatprep.subr.bf16.mxu0 0
      %1034 = vmatpush2.bf16.msra.mxu0 0
      %1035 = vmatprep.subr.bf16.mxu0 0
      %1036 = vmatpush2.bf16.msra.mxu0 0
      %1037 = vmatprep.subr.bf16.mxu0 0
      %1038 = vmatpush2.bf16.msra.mxu0 0
      %1039 = vmatprep.subr.bf16.mxu0 0
      %1040 = vmatpush2.bf16.msra.mxu0 0
      %1041 = vmatprep.subr.bf16.mxu0 0
      %1042 = vmatpush2.bf16.msra.mxu0 0
      %1043 = vmatprep.subr.bf16.mxu0 0
      %1044 = vmatpush2.bf16.msra.mxu0 0
      %1045 = vmatprep.subr.bf16.mxu0 0
      %1046 = vmatpush2.bf16.msra.mxu0 %v981
      %1047 = vmatprep.mubr.bf16.mxu0 %v992
      %1048 = vmatmul.mubr.bf16.gmra.mxu0 %v889
      %v1049 = vpop.f32.mrf.mxu0
      %v1050 = vadd.f32 %v935, %v1049
      %v1051 = vpop.f32.mrf.mxu0
      %v1052 = vpop.f32.mrf.mxu0
      %v1053 = vadd.f32 %v935, %v1052
      %v1054 = vpop.f32.mrf.mxu0
      %1055 = vmatprep.mubr.bf16.mxu0 %v995
      %1056 = vmatmul.mubr.bf16.gmra.mxu0 %v892
      %v1057 = vpop.f32.mrf.mxu0
      %v1058 = vadd.f32 %v935, %v1057
      %v1059 = vpop.f32.mrf.mxu0
      %v1060 = vpop.f32.mrf.mxu0
      %v1061 = vadd.f32 %v935, %v1060
      %v1062 = vpop.f32.mrf.mxu0
      %1063 = vmatprep.mubr.bf16.mxu0 %v998
      %1064 = vmatmul.mubr.bf16.gmra.mxu0 %v895
      %v1065 = vpop.f32.mrf.mxu0
      %v1066 = vadd.f32 %v935, %v1065
      %v1067 = vpop.f32.mrf.mxu0
      %v1068 = vpop.f32.mrf.mxu0
      %v1069 = vadd.f32 %v935, %v1068
      %v1070 = vpop.f32.mrf.mxu0
      %1071 = vmatprep.mubr.bf16.mxu0 %v1001
      %1072 = vmatmul.mubr.bf16.gmra.mxu0 %v898
      %v1073 = vpop.f32.mrf.mxu0
      %v1074 = vadd.f32 %v935, %v1073
      %v1075 = vpop.f32.mrf.mxu0
      %v1076 = vpop.f32.mrf.mxu0
      %v1077 = vadd.f32 %v935, %v1076
      %v1078 = vpop.f32.mrf.mxu0
      %1079 = vmatprep.mubr.bf16.mxu0 %v1004
      %1080 = vmatmul.mubr.bf16.gmra.mxu0 %v901
      %v1081 = vpop.f32.mrf.mxu0
      %v1082 = vadd.f32 %v935, %v1081
      %v1083 = vpop.f32.mrf.mxu0
      %v1084 = vpop.f32.mrf.mxu0
      %v1085 = vadd.f32 %v935, %v1084
      %v1086 = vpop.f32.mrf.mxu0
      %1087 = vmatprep.mubr.bf16.mxu0 %v1007
      %1088 = vmatmul.mubr.bf16.gmra.mxu0 %v904
      %v1089 = vpop.f32.mrf.mxu0
      %v1090 = vadd.f32 %v935, %v1089
      %v1091 = vpop.f32.mrf.mxu0
      %v1092 = vpop.f32.mrf.mxu0
      %v1093 = vadd.f32 %v935, %v1092
      %v1094 = vpop.f32.mrf.mxu0
      %1095 = vmatprep.mubr.bf16.mxu0 %v1010
      %1096 = vmatmul.mubr.bf16.gmra.mxu0 %v907
      %v1097 = vpop.f32.mrf.mxu0
      %v1098 = vadd.f32 %v935, %v1097
      %v1099 = vpop.f32.mrf.mxu0
      %v1100 = vpop.f32.mrf.mxu0
      %v1101 = vadd.f32 %v935, %v1100
      %v1102 = vpop.f32.mrf.mxu0
      %1103 = vmatprep.mubr.bf16.mxu0 %v1013
      %1104 = vmatmul.mubr.bf16.gmra.mxu0 %v910
      %v1105 = vpop.f32.mrf.mxu0
      %v1106 = vadd.f32 %v935, %v1105
      %v1107 = vpop.f32.mrf.mxu0
      %v1108 = vpop.f32.mrf.mxu0
      %v1109 = vadd.f32 %v935, %v1108
      %v1110 = vpop.f32.mrf.mxu0
      %1111 = vdwg.mxu0
      %v1112 = vpack.c.bf16 %v1053, %v1050
      %v1113 = vpack.c.bf16 %v1061, %v1058
      %v1114 = vpack.c.bf16 %v1069, %v1066
      %v1115 = vpack.c.bf16 %v1077, %v1074
      %v1116 = vpack.c.bf16 %v1085, %v1082
      %v1117 = vpack.c.bf16 %v1093, %v1090
      %v1118 = vpack.c.bf16 %v1101, %v1098
      %v1119 = vpack.c.bf16 %v1109, %v1106
      %v1128 = vunpack.c.l.b16 %v1112
      %v1129 = vunpack.c.h.b16 %v1112
      %v1130 = vunpack.c.l.b16 %v1113
      %v1131 = vunpack.c.h.b16 %v1113
      %v1132 = vunpack.c.l.b16 %v1114
      %v1133 = vunpack.c.h.b16 %v1114
      %v1134 = vunpack.c.l.b16 %v1115
      %v1135 = vunpack.c.h.b16 %v1115
      %v1136 = vunpack.c.l.b16 %v1116
      %v1137 = vunpack.c.h.b16 %v1116
      %v1138 = vunpack.c.l.b16 %v1117
      %v1139 = vunpack.c.h.b16 %v1117
      %v1140 = vunpack.c.l.b16 %v1118
      %v1141 = vunpack.c.h.b16 %v1118
      %v1142 = vunpack.c.l.b16 %v1119
      %v1143 = vunpack.c.h.b16 %v1119
      %v1144 = vpack.c.b16 %v1128, %v1128
      %v1145 = vpack.c.b16 %v1129, %v1129
      %v1146 = vpack.c.b16 %v1130, %v1130
      %v1147 = vpack.c.b16 %v1131, %v1131
      %v1148 = vpack.c.b16 %v1132, %v1132
      %v1149 = vpack.c.b16 %v1133, %v1133
      %v1150 = vpack.c.b16 %v1134, %v1134
      %v1151 = vpack.c.b16 %v1135, %v1135
      %v1152 = vpack.c.b16 %v1136, %v1136
      %v1153 = vpack.c.b16 %v1137, %v1137
      %v1154 = vpack.c.b16 %v1138, %v1138
      %v1155 = vpack.c.b16 %v1139, %v1139
      %v1156 = vpack.c.b16 %v1140, %v1140
      %v1157 = vpack.c.b16 %v1141, %v1141
      %v1158 = vpack.c.b16 %v1142, %v1142
      %v1159 = vpack.c.b16 %v1143, %v1143
      %vm1176 = vcmask 60416
      %1177 = vst.msk [vmem:[%s192] sm:$0xf] %vm1176, %v1144
      %1178 = vst.msk [vmem:[%s192 + $0x4] sm:$0xf] %vm1176, %v1145
      %1179 = vst.msk [vmem:[%s192 + $0x8] sm:$0xf] %vm1176, %v1146
      %1180 = vst.msk [vmem:[%s192 + $0xc] sm:$0xf] %vm1176, %v1147
      %1181 = vst.msk [vmem:[%s192 + $0x10] sm:$0xf] %vm1176, %v1148
      %1182 = vst.msk [vmem:[%s192 + $0x14] sm:$0xf] %vm1176, %v1149
      %1183 = vst.msk [vmem:[%s192 + $0x18] sm:$0xf] %vm1176, %v1150
      %1184 = vst.msk [vmem:[%s192 + $0x1c] sm:$0xf] %vm1176, %v1151
      %1185 = vst.msk [vmem:[%s192 + $0x20] sm:$0xf] %vm1176, %v1152
      %1186 = vst.msk [vmem:[%s192 + $0x24] sm:$0xf] %vm1176, %v1153
      %1187 = vst.msk [vmem:[%s192 + $0x28] sm:$0xf] %vm1176, %v1154
      %1188 = vst.msk [vmem:[%s192 + $0x2c] sm:$0xf] %vm1176, %v1155
      %1189 = vst.msk [vmem:[%s192 + $0x30] sm:$0xf] %vm1176, %v1156
      %1190 = vst.msk [vmem:[%s192 + $0x34] sm:$0xf] %vm1176, %v1157
      %1191 = vst.msk [vmem:[%s192 + $0x38] sm:$0xf] %vm1176, %v1158
      %1192 = vst.msk [vmem:[%s192 + $0x3c] sm:$0xf] %vm1176, %v1159
      %s1193 = smul.u32 16, %s19
      %p1194 = scmp.lt.s32.totalorder %s18, 1
      %s1195 = scalar_select %p1194, %s18, 1
      %p1196 = scmp.lt.s32.totalorder %s1193, 31
      %s1197 = scalar_select %p1196, %s1193, 31
      %s1198 = smul.addr %s1195, 32
      %s1199 = sadd.s32 %s1197, %s1198
      %s1200 = smul.addr %s1199, 4
      %s1201 = scalar_lea.vmem %s3, %s1200
      // Predicated region
      $region33: #{tpu_custom_call.1} parent=31 // pred_check
        %p1202 = pneg %p114
      $region34: #{tpu_custom_call.1} parent=31 // pred_check_branch
        %1204 = sbr.rel (%p1202) target = $region36
      $region35: #{tpu_custom_call.1} parent=31 // pred_region
        %s1205 = smul.u32 16, %s19
      $region36: #{tpu_custom_call.1} parent=31 // pred_fallthru
        _
    $region32: #{tpu_custom_call.1} parent=5 // pred_fallthru
      _
    %p1206 = scmp.le.s32.totalorder 2, %s9
    // Predicated region
    $region37: #{tpu_custom_call.1} parent=5 // pred_check
      %p1207 = pneg %p1206
    $region38: #{tpu_custom_call.1} parent=5 // pred_check_branch
      %1209 = sbr.rel (%p1207) target = $region40
    $region39: #{tpu_custom_call.1} parent=5 // pred_region
      %s1210 = ssub.s32 %s9, 2
      // Predicated region
      $region41: #{tpu_custom_call.1} parent=39 // pred_check
        %p1211 = pneg %p120
      $region42: #{tpu_custom_call.1} parent=39 // pred_check_branch
        %1213 = sbr.rel (%p1211) target = $region44
      $region43: #{tpu_custom_call.1} parent=39 // pred_region
        %s1214 = smul.u32 16, %s21
        %p1215 = scmp.lt.s32.totalorder %s20, 1
        %s1216 = scalar_select %p1215, %s20, 1
        %p1217 = scmp.lt.s32.totalorder %s1214, 31
        %s1218 = scalar_select %p1217, %s1214, 31
        %s1219 = smul.addr %s1216, 32
        %s1220 = sadd.s32 %s1218, %s1219
        %s1221 = smul.addr %s1220, 4
        %s1222 = scalar_lea.vmem %s3, %s1221
      $region44: #{tpu_custom_call.1} parent=39 // pred_fallthru
        _
    $region40: #{tpu_custom_call.1} parent=5 // pred_fallthru
      _
  $region6: #{tpu_custom_call.1} parent=0 // loop_footer
    %s13 = sadd.s32 1, %s9
  $region7: #{tpu_custom_call.1} parent=0 // loop_footer_branch
    %8 = sbr.rel target = $region3
  $region8: #{tpu_custom_call.1} parent=0 // loop_exit
    _

</llo_original>
